<compile_context>
chip_gen: v7x
topology: tpu7x:2x2x1
jax: 0.10.0
libtpu: 0.0.40
codegen_flags: <defaults>
</compile_context>

<pallas_src>
import math

import jax
import jax.numpy as jnp
from jax.experimental import pallas as pl
from jax.experimental.pallas import tpu as pltpu

EPS = 1e-12  # matches the reference module's default (eps inside the sqrt)


# ----------------------------------------------------------------------------
# In-kernel helpers (traced inside Pallas kernels)
# ----------------------------------------------------------------------------
def _ln(x, w, b):
    """TF-style LayerNorm over the last dim (eps inside the sqrt)."""
    u = jnp.mean(x, axis=-1, keepdims=True)
    xc = x - u
    s = jnp.mean(xc * xc, axis=-1, keepdims=True)
    return w * (xc * jax.lax.rsqrt(s + EPS)) + b


def _row_tile(n, tile):
    """Row-tile size: full slab if it fits one tile, else an 8-aligned tile."""
    return n if n <= tile else tile


_PARALLEL1 = pltpu.CompilerParams(dimension_semantics=("parallel",))


# ----------------------------------------------------------------------------
# Kernel 0: standalone LayerNorm (the spec module) over a (N, H) row slab
# ----------------------------------------------------------------------------
def _ln_kernel(x_ref, w_ref, b_ref, o_ref):
    o_ref[...] = _ln(x_ref[...], w_ref[0], b_ref[0])


def layer_norm(x, weight, bias, *, tile_rows=512):
    """LayerNorm over the last dim of x (any leading shape)."""
    shp = x.shape
    H = shp[-1]
    x2 = x.reshape(-1, H)
    N = x2.shape[0]
    tn = _row_tile(N, tile_rows)
    out = pl.pallas_call(
        _ln_kernel,
        out_shape=jax.ShapeDtypeStruct((N, H), jnp.float32),
        grid=(pl.cdiv(N, tn),),
        in_specs=[
            pl.BlockSpec((tn, H), lambda i: (i, 0)),
            pl.BlockSpec((1, H), lambda i: (0, 0)),
            pl.BlockSpec((1, H), lambda i: (0, 0)),
        ],
        out_specs=pl.BlockSpec((tn, H), lambda i: (i, 0)),
        compiler_params=_PARALLEL1,
    )(x2, weight.reshape(1, -1), bias.reshape(1, -1))
    return out.reshape(shp)


# ----------------------------------------------------------------------------
# Kernel 1 (fused): LN(V) -> Linear(V,H) -> ReLU -> LN(H) -> +PE -> LN(H)
#   outputs both the pre-PE video embedding (vf) and the position-encoded,
#   normalized hidden state (needed once when the extra streams are None).
# ----------------------------------------------------------------------------
def _video_pe_ln_kernel(x_ref, pe_ref, ln1w, ln1b, w_ref, b_ref,
                        ln2w, ln2b, ln3w, ln3b, vf_ref, hid_ref):
    x = x_ref[...]                                          # (TN, V)
    xn = _ln(x, ln1w[0], ln1b[0])
    y = jnp.dot(xn.astype(jnp.bfloat16), w_ref[...].astype(jnp.bfloat16),
                preferred_element_type=jnp.float32) + b_ref[0]
    y = jnp.maximum(y, 0.0)                                 # ReLU
    vf = _ln(y, ln2w[0], ln2b[0])
    vf_ref[...] = vf
    hid_ref[...] = _ln(vf + pe_ref[...], ln3w[0], ln3b[0])


def video_emb_pe_ln(x, pe_full, p, *, tile_rows=512):
    B, L, V = x.shape
    H = p["ve_w"].shape[1]
    N = B * L
    x2 = x.reshape(N, V)
    pe = jnp.tile(pe_full[:L, :], (B, 1))                   # (N, H), per-row PE
    tn = _row_tile(N, tile_rows)
    row = lambda a: a.reshape(1, -1)
    vf, hid = pl.pallas_call(
        _video_pe_ln_kernel,
        out_shape=(jax.ShapeDtypeStruct((N, H), jnp.float32),
                   jax.ShapeDtypeStruct((N, H), jnp.float32)),
        grid=(pl.cdiv(N, tn),),
        in_specs=[
            pl.BlockSpec((tn, V), lambda i: (i, 0)),
            pl.BlockSpec((tn, H), lambda i: (i, 0)),
            pl.BlockSpec((1, V), lambda i: (0, 0)),
            pl.BlockSpec((1, V), lambda i: (0, 0)),
            pl.BlockSpec((V, H), lambda i: (0, 0)),
            pl.BlockSpec((1, H), lambda i: (0, 0)),
            pl.BlockSpec((1, H), lambda i: (0, 0)),
            pl.BlockSpec((1, H), lambda i: (0, 0)),
            pl.BlockSpec((1, H), lambda i: (0, 0)),
            pl.BlockSpec((1, H), lambda i: (0, 0)),
        ],
        out_specs=(pl.BlockSpec((tn, H), lambda i: (i, 0)),
                   pl.BlockSpec((tn, H), lambda i: (i, 0))),
        compiler_params=_PARALLEL1,
    )(x2, pe, row(p["ve_ln1_w"]), row(p["ve_ln1_b"]), p["ve_w"], row(p["ve_b"]),
      row(p["ve_ln2_w"]), row(p["ve_ln2_b"]), row(p["ln_w"]), row(p["ln_b"]))
    return vf.reshape(B, L, H), hid.reshape(B, L, H)


# ----------------------------------------------------------------------------
# Kernel 2: position-encoding add + LayerNorm  (fallback path, only used when
#           extra feature streams are concatenated; row-slab layout)
# ----------------------------------------------------------------------------
def _posln_kernel(x_ref, pe_ref, w_ref, b_ref, o_ref):
    o_ref[...] = _ln(x_ref[...] + pe_ref[...], w_ref[0], b_ref[0])


def pos_layernorm(x, pe_full, p, *, tile_rows=512):
    B, L, H = x.shape
    N = B * L
    pe = jnp.tile(pe_full[:L, :], (B, 1))
    tn = _row_tile(N, tile_rows)
    out = pl.pallas_call(
        _posln_kernel,
        out_shape=jax.ShapeDtypeStruct((N, H), jnp.float32),
        grid=(pl.cdiv(N, tn),),
        in_specs=[
            pl.BlockSpec((tn, H), lambda i: (i, 0)),
            pl.BlockSpec((tn, H), lambda i: (i, 0)),
            pl.BlockSpec((1, H), lambda i: (0, 0)),
            pl.BlockSpec((1, H), lambda i: (0, 0)),
        ],
        out_specs=pl.BlockSpec((tn, H), lambda i: (i, 0)),
        compiler_params=_PARALLEL1,
    )(x.reshape(N, H), pe, p["ln_w"].reshape(1, -1), p["ln_b"].reshape(1, -1))
    return out.reshape(B, L, H)


# ----------------------------------------------------------------------------
# Kernel 3: generic Linear  (x @ W + b), tiled over rows
# ----------------------------------------------------------------------------
def _linear_kernel(x_ref, w_ref, b_ref, o_ref):
    o_ref[...] = (
        jnp.dot(x_ref[...].astype(jnp.bfloat16), w_ref[...].astype(jnp.bfloat16),
                preferred_element_type=jnp.float32)
        + b_ref[0]
    )


def linear2d(x2d, w, b, *, tile_rows=256):
    N, Din = x2d.shape
    Dout = w.shape[1]
    tn = _row_tile(N, tile_rows)
    return pl.pallas_call(
        _linear_kernel,
        out_shape=jax.ShapeDtypeStruct((N, Dout), jnp.float32),
        grid=(pl.cdiv(N, tn),),
        in_specs=[
            pl.BlockSpec((tn, Din), lambda i: (i, 0)),
            pl.BlockSpec((Din, Dout), lambda i: (0, 0)),
            pl.BlockSpec((1, Dout), lambda i: (0, 0)),
        ],
        out_specs=pl.BlockSpec((tn, Dout), lambda i: (i, 0)),
        compiler_params=_PARALLEL1,
    )(x2d, w, b.reshape(1, -1))


def linear_nd(x, w, b):
    shp = x.shape
    out = linear2d(x.reshape(-1, shp[-1]), w, b)
    return out.reshape(*shp[:-1], w.shape[1])


# ----------------------------------------------------------------------------
# Kernel 4: "sentence" additive-attention aggregation (the O(L^2 H) hot path)
#   f[i,j]   = Wf[i] + U[j] + bias
#   a[i,j]   = softmax_j( w . tanh(f[i,j]) )   (scalar logit bias wb dropped:
#                                               softmax is shift-invariant)
#   out[i]   = sum_j a[i,j] * f[i,j]  ==  Wf[i] + bias + (a @ U)[i]
# ----------------------------------------------------------------------------
def _attn_agg_kernel(wf_ref, u_ref, bias_ref, wv_ref, o_ref):
    wf = wf_ref[0]                                           # (L, H)
    u = u_ref[0]                                             # (L, H)
    bias = bias_ref[0]                                       # (H,)
    f = wf[:, None, :] + u[None, :, :] + bias                # (L, L, H)
    logits = jnp.sum(jnp.tanh(f) * wv_ref[0], axis=-1)       # (L, L)
    logits = logits - jnp.max(logits, axis=1, keepdims=True)
    e = jnp.exp(logits)
    a = e * pl.reciprocal(jnp.sum(e, axis=1, keepdims=True), approx=True)
    # Exact rewrite of sum_j a[i,j]*f[i,j]: softmax rows sum to 1, so the
    # wf[i]+bias term factors out and the remainder is an MXU matmul a @ u.
    agg = jnp.dot(a.astype(jnp.bfloat16), u.astype(jnp.bfloat16),
                  preferred_element_type=jnp.float32)
    o_ref[0] = wf + bias + agg


def attn_aggregate(wf, u, bias, w_vec):
    B, L, H = wf.shape
    return pl.pallas_call(
        _attn_agg_kernel,
        out_shape=jax.ShapeDtypeStruct((B, L, H), jnp.float32),
        grid=(B,),
        in_specs=[
            pl.BlockSpec((1, L, H), lambda b: (b, 0, 0)),
            pl.BlockSpec((1, L, H), lambda b: (b, 0, 0)),
            pl.BlockSpec((1, H), lambda b: (0, 0)),
            pl.BlockSpec((1, H), lambda b: (0, 0)),
        ],
        out_specs=pl.BlockSpec((1, L, H), lambda b: (b, 0, 0)),
        compiler_params=_PARALLEL1,
    )(wf, u, bias.reshape(1, -1), w_vec.reshape(1, -1))


# ----------------------------------------------------------------------------
# Bidirectional LSTM (PyTorch nn.LSTM semantics, batch_first, 1 layer)
# ----------------------------------------------------------------------------
def _lstm_direction(x_t, w_ih, w_hh, b_ih, b_hh):
    # x_t: (L, B, D)
    hid = w_hh.shape[1]
    B = x_t.shape[1]

    def step(carry, xt):
        h, c = carry
        gates = xt @ w_ih.T + b_ih + h @ w_hh.T + b_hh        # (B, 4*hid)
        i, f, g, o = jnp.split(gates, 4, axis=-1)             # torch gate order
        i = jax.nn.sigmoid(i)
        f = jax.nn.sigmoid(f)
        g = jnp.tanh(g)
        o = jax.nn.sigmoid(o)
        c = f * c + i * g
        h = o * jnp.tanh(c)
        return (h, c), h

    h0 = jnp.zeros((B, hid), jnp.float32)
    c0 = jnp.zeros((B, hid), jnp.float32)
    _, hs = jax.lax.scan(step, (h0, c0), x_t)
    return hs                                                 # (L, B, hid)


def bilstm(x, p):
    # x: (B, L, D) batch_first -> output (B, L, 2*hid)
    xt = jnp.transpose(x, (1, 0, 2))
    fwd = _lstm_direction(xt, p["lstm_fw_wih"], p["lstm_fw_whh"],
                          p["lstm_fw_bih"], p["lstm_fw_bhh"])
    bwd = _lstm_direction(xt[::-1], p["lstm_bw_wih"], p["lstm_bw_whh"],
                          p["lstm_bw_bih"], p["lstm_bw_bhh"])[::-1]
    out = jnp.concatenate([fwd, bwd], axis=-1)
    return jnp.transpose(out, (1, 0, 2))


# ----------------------------------------------------------------------------
# SFT.sentence(...)
# ----------------------------------------------------------------------------
def sentence_branch(visual_feats, subject_feats, predict_feats, p):
    W_f2d = linear_nd(visual_feats, p["Ws_w"], p["Ws_b"])
    U_objs = linear_nd(subject_feats, p["Uo_w"], p["Uo_b"])
    U_motion = linear_nd(predict_feats, p["Um_w"], p["Um_b"])

    # wo_b / wm_b (scalar logit biases) are dropped inside the kernel:
    # softmax over j is invariant to adding a constant to every logit.
    attn_objects = attn_aggregate(W_f2d, U_objs, p["bo"], p["wo_w"][:, 0])
    attn_motion = attn_aggregate(W_f2d, U_motion, p["bm"], p["wm_w"][:, 0])

    features = jnp.concatenate([visual_feats, attn_motion, attn_objects], axis=-1)
    output = bilstm(features, p)                              # (B, L, H)
    video = jnp.max(output, axis=1)                           # (B, H)
    video_semantics = linear2d(video, p["fc_w"], p["fc_b"])   # (B, S)
    return output, video_semantics


# ----------------------------------------------------------------------------
# SFT.forward (use_subject=False, use_predict=False, use_sentence=False,
#              dropout in eval mode)
# ----------------------------------------------------------------------------
def sft_forward(p, pe_full, visual_feats, subject_feats=None, query_embed=None,
                predict_feats=None, sentence_feats=None, input_mask=None):
    # Fused video_embeddings + PE + LayerNorm over the (B*L) row slab.
    vf, vf_hidden = video_emb_pe_ln(visual_feats, pe_full, p)

    def hidden_for(extra):
        if extra is None:
            return vf_hidden          # cat() is identity -> all three streams equal
        return pos_layernorm(jnp.concatenate([vf, extra], axis=1), pe_full, p)

    subject_hidden = hidden_for(subject_feats)
    predict_hidden = hidden_for(predict_feats)
    sentence_hidden = hidden_for(sentence_feats)

    # NOTE: the self_attn / dense / LayerNorm chain that builds
    # `memory_hidden_states` (and uses query_embed / input_mask) only influences
    # the returned values when use_subject=True.  With the module's default
    # use_subject=False it is dead code w.r.t. the outputs, so it is omitted.

    salient_subjects = subject_hidden                                   # (B, L, H)
    object_semantics = linear_nd(salient_subjects, p["fc_w"], p["fc_b"])  # (B, L, S)

    action = jnp.max(predict_hidden, axis=1)                            # (B, H)
    action_features = predict_hidden                                    # (B, L, H)
    action_semantics = linear2d(action, p["fc_w"], p["fc_b"])           # (B, S)

    video_features, video_semantics = sentence_branch(
        sentence_hidden, salient_subjects, action_features, p)

    return [salient_subjects, action_features, video_features,
            object_semantics, action_semantics, video_semantics]


# ----------------------------------------------------------------------------
# Deterministic parameter / positional-encoding construction
# ----------------------------------------------------------------------------
def make_pe(max_len, n_filters):
    pos = jnp.arange(max_len, dtype=jnp.float32)[:, None]
    div = jnp.exp(jnp.arange(0, n_filters, 2, dtype=jnp.float32)
                  * (-(math.log(10000.0) / n_filters)))
    pe = jnp.zeros((max_len, n_filters), jnp.float32)
    pe = pe.at[:, 0::2].set(jnp.sin(pos * div))
    pe = pe.at[:, 1::2].set(jnp.cos(pos * div))
    return pe


def init_params(key, V, H, S):
    ks = jax.random.split(key, 16)

    def lin(k, din, dout):
        kw, kb = jax.random.split(k)
        w = (jax.random.normal(kw, (din, dout), jnp.float32) / jnp.sqrt(din))
        b = jax.random.normal(kb, (dout,), jnp.float32) * 0.01
        return w, b

    p = {}
    # video_embeddings: LN(V) -> Dropout -> Linear(V,H) -> ReLU -> LN(H)
    p["ve_ln1_w"] = jnp.ones((V,), jnp.float32)
    p["ve_ln1_b"] = jnp.zeros((V,), jnp.float32)
    p["ve_w"], p["ve_b"] = lin(ks[0], V, H)
    p["ve_ln2_w"] = jnp.ones((H,), jnp.float32)
    p["ve_ln2_b"] = jnp.zeros((H,), jnp.float32)
    # shared LayerNorm
    p["ln_w"] = jnp.ones((H,), jnp.float32)
    p["ln_b"] = jnp.zeros((H,), jnp.float32)
    # fc_layer: Linear(H, S)
    p["fc_w"], p["fc_b"] = lin(ks[1], H, S)
    # sentence-branch projections
    p["Ws_w"], p["Ws_b"] = lin(ks[2], H, H)
    p["Uo_w"], p["Uo_b"] = lin(ks[3], H, H)
    p["Um_w"], p["Um_b"] = lin(ks[4], H, H)
    p["bo"] = jnp.ones((H,), jnp.float32)   # nn.Parameter(torch.ones(H))
    p["bm"] = jnp.ones((H,), jnp.float32)
    p["wo_w"], p["wo_b"] = lin(ks[5], H, 1)   # wo_b/wm_b unused (softmax shift-invariant)
    p["wm_w"], p["wm_b"] = lin(ks[6], H, 1)
    # bidirectional LSTM: input 3H, hidden H//2
    hid = H // 2
    for name, kk in (("fw", ks[7]), ("bw", ks[8])):
        k1, k2, k3, k4 = jax.random.split(kk, 4)
        p[f"lstm_{name}_wih"] = (jax.random.normal(k1, (4 * hid, 3 * H), jnp.float32)
                                 / jnp.sqrt(3 * H))
        p[f"lstm_{name}_whh"] = (jax.random.normal(k2, (4 * hid, hid), jnp.float32)
                                 / jnp.sqrt(hid))
        p[f"lstm_{name}_bih"] = jax.random.normal(k3, (4 * hid,), jnp.float32) * 0.01
        p[f"lstm_{name}_bhh"] = jax.random.normal(k4, (4 * hid,), jnp.float32) * 0.01
    return p


# ----------------------------------------------------------------------------
if __name__ == "__main__":
    B, L = 2, 8                 # batch, sequence length
    V, H, S = 32, 32, 16        # visual_dim, hidden_dim, semantics_dim
    M = 4                       # max_objects
    MAX_LEN = 1000

    key = jax.random.PRNGKey(0)
    k_x, k_q = jax.random.split(key, 2)
    visual_feats = jax.random.normal(k_x, (B, L, V), jnp.float32)
    query_embed = jax.random.normal(k_q, (M, H), jnp.float32)   # unused (use_subject=False)
    input_mask = jnp.zeros((B, L), jnp.bool_)                   # unused (use_subject=False)

    params = init_params(jax.random.PRNGKey(1), V, H, S)
    pe_full = make_pe(MAX_LEN, H)

    # --- standalone LayerNorm kernel (the spec module) numeric check ---------
    ln_w = jnp.ones((V,), jnp.float32) * 1.3
    ln_b = jnp.ones((V,), jnp.float32) * 0.1
    y_kernel = layer_norm(visual_feats, ln_w, ln_b)
    u = jnp.mean(visual_feats, axis=-1, keepdims=True)
    s = jnp.mean((visual_feats - u) ** 2, axis=-1, keepdims=True)
    y_ref = ln_w * ((visual_feats - u) / jnp.sqrt(s + EPS)) + ln_b
    assert y_kernel.shape == visual_feats.shape
    assert jnp.max(jnp.abs(y_kernel - y_ref)) < 1e-3

    # --- full SFT forward (default flags: extra streams None) ----------------
    outs = sft_forward(params, pe_full, visual_feats,
                       subject_feats=None, query_embed=query_embed,
                       predict_feats=None, sentence_feats=None,
                       input_mask=input_mask)
    jax.block_until_ready(outs)

    # quick shape sanity
    assert outs[0].shape == (B, L, H)      # salient_subjects
    assert outs[1].shape == (B, L, H)      # action_features
    assert outs[2].shape == (B, L, H)      # video_features
    assert outs[3].shape == (B, L, S)      # object_semantics
    assert outs[4].shape == (B, S)         # action_semantics
    assert outs[5].shape == (B, S)         # video_semantics
    print("KERNEL_OK")
</pallas_src>

<mosaic_0001>
module attributes {stable_mosaic.version = 11 : i64} {
  func.func @_ln_kernel(%arg0: i32, %arg1: memref<16x32xf32, #tpu.memory_space<vmem>>, %arg2: memref<1x32xf32, #tpu.memory_space<vmem>>, %arg3: memref<1x32xf32, #tpu.memory_space<vmem>>, %arg4: memref<16x32xf32, #tpu.memory_space<vmem>>) attributes {dimension_semantics = [#tpu.dimension_semantics<parallel>], iteration_bounds = array<i64: 1>, scalar_prefetch = 0 : i64, scratch_operands = 0 : i64, tpu.core_type = #tpu.core_type<tc>, window_params = [{transform_indices = @transform_0, window_bounds = array<i64: 16, 32>}, {pipeline_mode = #tpu.pipeline_mode<synchronous>, transform_indices = @transform_1, window_bounds = array<i64: 1, 32>}, {pipeline_mode = #tpu.pipeline_mode<synchronous>, transform_indices = @transform_2, window_bounds = array<i64: 1, 32>}, {transform_indices = @transform_3, window_bounds = array<i64: 16, 32>}]} {
    %c0 = arith.constant 0 : index
    %c0_0 = arith.constant 0 : index
    %0 = vector.load %arg1[%c0, %c0_0] : memref<16x32xf32, #tpu.memory_space<vmem>>, vector<16x32xf32>
    %c0_1 = arith.constant 0 : index
    %c0_2 = arith.constant 0 : index
    %1 = vector.load %arg2[%c0_1, %c0_2] : memref<1x32xf32, #tpu.memory_space<vmem>>, vector<1x32xf32>
    %2 = vector.shape_cast %1 : vector<1x32xf32> to vector<32xf32>
    %c0_3 = arith.constant 0 : index
    %c0_4 = arith.constant 0 : index
    %3 = vector.load %arg3[%c0_3, %c0_4] : memref<1x32xf32, #tpu.memory_space<vmem>>, vector<1x32xf32>
    %4 = vector.shape_cast %3 : vector<1x32xf32> to vector<32xf32>
    %cst = arith.constant dense<0.000000e+00> : vector<16xf32>
    %5 = vector.multi_reduction <add>, %0, %cst [1] : vector<16x32xf32> to vector<16xf32>
    %6 = vector.shape_cast %5 : vector<16xf32> to vector<16x1xf32>
    %cst_5 = arith.constant 3.200000e+01 : f32
    %7 = vector.broadcast %cst_5 : f32 to vector<16x1xf32>
    %8 = arith.divf %6, %7 : vector<16x1xf32>
    %9 = vector.broadcast %8 : vector<16x1xf32> to vector<16x32xf32>
    %10 = arith.subf %0, %9 : vector<16x32xf32>
    %11 = arith.mulf %10, %10 : vector<16x32xf32>
    %cst_6 = arith.constant dense<0.000000e+00> : vector<16xf32>
    %12 = vector.multi_reduction <add>, %11, %cst_6 [1] : vector<16x32xf32> to vector<16xf32>
    %13 = vector.shape_cast %12 : vector<16xf32> to vector<16x1xf32>
    %cst_7 = arith.constant 3.200000e+01 : f32
    %14 = vector.broadcast %cst_7 : f32 to vector<16x1xf32>
    %15 = arith.divf %13, %14 : vector<16x1xf32>
    %cst_8 = arith.constant 9.99999996E-13 : f32
    %16 = vector.broadcast %cst_8 : f32 to vector<16x1xf32>
    %17 = arith.addf %15, %16 : vector<16x1xf32>
    %18 = math.rsqrt %17 : vector<16x1xf32>
    %19 = vector.broadcast %18 : vector<16x1xf32> to vector<16x32xf32>
    %20 = arith.mulf %10, %19 : vector<16x32xf32>
    %21 = vector.shape_cast %2 : vector<32xf32> to vector<1x32xf32>
    %22 = vector.broadcast %21 : vector<1x32xf32> to vector<16x32xf32>
    %23 = arith.mulf %22, %20 : vector<16x32xf32>
    %24 = vector.shape_cast %4 : vector<32xf32> to vector<1x32xf32>
    %25 = vector.broadcast %24 : vector<1x32xf32> to vector<16x32xf32>
    %26 = arith.addf %23, %25 : vector<16x32xf32>
    %c0_9 = arith.constant 0 : index
    %c0_10 = arith.constant 0 : index
    %27 = vector.load %arg4[%c0_9, %c0_10] : memref<16x32xf32, #tpu.memory_space<vmem>>, vector<16x32xf32>
    tpu.vector_store %arg4[%c0_9, %c0_10], %26 {strides = array<i32>} : memref<16x32xf32, #tpu.memory_space<vmem>>, vector<16x32xf32>,
    return
  }
  func.func @transform_0(%arg0: i32) -> (i32, i32) {
    %c0_i32 = arith.constant 0 : i32
    %c0_i32_0 = arith.constant 0 : i32
    return %arg0, %c0_i32 : i32, i32
  }
  func.func @transform_1(%arg0: i32) -> (i32, i32) {
    %c0_i32 = arith.constant 0 : i32
    %c0_i32_0 = arith.constant 0 : i32
    %c0_i32_1 = arith.constant 0 : i32
    return %c0_i32, %c0_i32_0 : i32, i32
  }
  func.func @transform_2(%arg0: i32) -> (i32, i32) {
    %c0_i32 = arith.constant 0 : i32
    %c0_i32_0 = arith.constant 0 : i32
    %c0_i32_1 = arith.constant 0 : i32
    return %c0_i32, %c0_i32_0 : i32, i32
  }
  func.func @transform_3(%arg0: i32) -> (i32, i32) {
    %c0_i32 = arith.constant 0 : i32
    %c0_i32_0 = arith.constant 0 : i32
    return %arg0, %c0_i32 : i32, i32
  }
}

</mosaic_0001>

<llo_original>
// kernel: tpu_custom_call.1
$region0: #{tpu_custom_call.1}
  #allocation0 [shape = 'u32[]', space=smem, size = 0x4, offset = 0x4, fixed_abs, tag = 'smem constant byte address 0x4 - core index']
  #allocation1 [shape = 'u32[144,128]{1,0:T(1,128)}', space=vmem, size = 0x12000, scoped, tag = 'internal scratch']
  %s0 = inlined_call_operand.hbm [shape: f32[16,32], index: 0, kind: input, shape index: {}]
  %s1 = inlined_call_operand.vmem [shape: f32[1,32], index: 1, kind: input, shape index: {}]
  %s2 = inlined_call_operand.vmem [shape: f32[1,32], index: 2, kind: input, shape index: {}]
  %s3 = inlined_call_operand.hbm [shape: f32[16,32], index: 3, kind: output, shape index: {}]
  %s4 = sld [smem:[#allocation0]]
  $region26: #{tpu_custom_call.1} parent=0
    _
  %s6 = ssub.s32 1, %s4
  %s7 = scalar_select 0, %s6, %s4
  $region1: #{tpu_custom_call.1} parent=0
    #allocation2 [shape = 'u8[8192]{0}', space=vmem, size = 0x2000, scoped, tag = 'input window, operand 0, single buffered']
    #allocation3 [shape = 's32[1]{0}', space=sflag, size = 0x4, scoped, tag = 'scoped memory for tpu_custom_call.1']
    #allocation4 [shape = 's32[1]{0}', space=sflag, size = 0x4, scoped, tag = 'scoped memory for tpu_custom_call.1']
    #allocation5 [shape = 'u8[8192]{0}', space=vmem, size = 0x2000, scoped, tag = 'output window, operand 0, single buffered']
    %8 = vsyncpa [#allocation3], 0
    %9 = vsyncpa [#allocation4], 0
    // Predicated region
    $region2: #{tpu_custom_call.1} parent=1 // pred_check
      _
    $region3: #{tpu_custom_call.1} parent=1 // pred_check_branch
      %11 = sbr.rel (0) target = $region5
    $region4: #{tpu_custom_call.1} parent=1 // pred_region
      %s13 = ssub.s32 256, 256
      %14 = vsyncadd [#allocation3], %s13
      %s15 = sshll.u32 [#allocation2], 4
      %s16 = int_to_ptr.vmem [resolvable:$true] %s15
      %21 = dma.hbm_to_vmem [thread:$0]  %s0, 256, %s16, [#allocation3], 128, 128, 8
    $region5: #{tpu_custom_call.1} parent=1 // pred_fallthru
      _
    // Predicated region
    $region6: #{tpu_custom_call.1} parent=1 // pred_check
      _
    $region7: #{tpu_custom_call.1} parent=1 // pred_check_branch
      %23 = sbr.rel (0) target = $region9
    $region8: #{tpu_custom_call.1} parent=1 // pred_region
      _
    $region9: #{tpu_custom_call.1} parent=1 // pred_fallthru
      _
    // Predicated region
    $region10: #{tpu_custom_call.1} parent=1 // pred_check
      _
    $region11: #{tpu_custom_call.1} parent=1 // pred_check_branch
      %25 = sbr.rel (0) target = $region13
    $region12: #{tpu_custom_call.1} parent=1 // pred_region
      _
    $region13: #{tpu_custom_call.1} parent=1 // pred_fallthru
      _
    // Predicated region
    $region14: #{tpu_custom_call.1} parent=1 // pred_check
      _
    $region15: #{tpu_custom_call.1} parent=1 // pred_check_branch
      %27 = sbr.rel (0) target = $region17
    $region16: #{tpu_custom_call.1} parent=1 // pred_region
      %28 = dma.done [#allocation3], 256
    $region17: #{tpu_custom_call.1} parent=1 // pred_fallthru
      _
    %v29 = vld [vmem:[#allocation2] sm:$0xff]
    %v30 = vld [vmem:[#allocation2 + $0x8] sm:$0xff]
    %v31 = vld [vmem:[%s1] sm:$0x1]
    %v32 = vld [vmem:[%s2] sm:$0x1]
    %vm33 = vcmask 261120
    %v34 = vsel %vm33, %v29, 0.0
    %35 = vadd.xlane.f32.xlu0 %v34
    %v36 = vpop.xlane.xlu0 %35
    %v37 = vsel %vm33, %v30, 0.0
    %38 = vadd.xlane.f32.xlu0 %v37
    %v39 = vpop.xlane.xlu0 %38
    %v40 = vrcp.pop 32.0
    %v41 = vmul.f32 %v36, %v40
    %v42 = vmul.f32 %v39, %v40
    %v43 = vsub.f32 %v29, %v41
    %v44 = vsub.f32 %v30, %v42
    %v45 = vmul.f32 %v43, %v43
    %v46 = vmul.f32 %v44, %v44
    %v47 = vsel %vm33, %v45, 0.0
    %48 = vadd.xlane.f32.xlu0 %v47
    %v49 = vpop.xlane.xlu0 %48
    %v50 = vsel %vm33, %v46, 0.0
    %51 = vadd.xlane.f32.xlu0 %v50
    %v52 = vpop.xlane.xlu0 %51
    %v53 = vmul.f32 %v49, %v40
    %v54 = vmul.f32 %v52, %v40
    %v55 = vadd.f32 %v53, 1e-12
    %v56 = vadd.f32 %v54, 1e-12
    %v57 = vrsqrt.pop %v55
    %v58 = vrsqrt.pop %v56
    %v59 = vmul.f32 %v43, %v57
    %v60 = vmul.f32 %v44, %v58
    %v62 = vlaneseq
    %v63 = vshrl.u32 %v62, 7
    %v64 = vsub.s32 0, %v63
    %v65 = vrot.slane %v31, %v64
    %v67 = vmul.f32 %v65, %v59
    %v68 = vmul.f32 %v65, %v60
    %v70 = vlaneseq
    %v71 = vshrl.u32 %v70, 7
    %v72 = vsub.s32 0, %v71
    %v73 = vrot.slane %v32, %v72
    %v75 = vadd.f32 %v67, %v73
    %v76 = vadd.f32 %v68, %v73
    %77 = vst.msk [vmem:[#allocation5] sm:$0xff] %vm33, %v75
    %78 = vst.msk [vmem:[#allocation5 + $0x8] sm:$0xff] %vm33, %v76
    // Predicated region
    $region18: #{tpu_custom_call.1} parent=1 // pred_check
      _
    $region19: #{tpu_custom_call.1} parent=1 // pred_check_branch
      %80 = sbr.rel (0) target = $region21
    $region20: #{tpu_custom_call.1} parent=1 // pred_region
      %s82 = ssub.s32 256, 256
      %83 = vsyncadd [#allocation4], %s82
      %s84 = sshll.u32 [#allocation5], 4
      %s85 = int_to_ptr.vmem [resolvable:$true] %s84
      %90 = dma.vmem_to_hbm [thread:$0]  %s85, 256, %s3, [#allocation4], 128, 128, 8
    $region21: #{tpu_custom_call.1} parent=1 // pred_fallthru
      _
    // Predicated region
    $region22: #{tpu_custom_call.1} parent=1 // pred_check
      _
    $region23: #{tpu_custom_call.1} parent=1 // pred_check_branch
      %92 = sbr.rel (0) target = $region25
    $region24: #{tpu_custom_call.1} parent=1 // pred_region
      %93 = dma.done [#allocation4], 256
    $region25: #{tpu_custom_call.1} parent=1 // pred_fallthru
      _
    %94 = vsyncpa [#allocation3], 1
    %95 = vsyncpa [#allocation4], 1

</llo_original>
